<compile_context>
chip_gen: v7x
topology: tpu7x:2x2x1
jax: 0.10.0
libtpu: 0.0.40
codegen_flags: <defaults>
</compile_context>

<pallas_src>
import jax
import jax.numpy as jnp
from jax.experimental import pallas as pl
from jax.experimental.pallas import tpu as pltpu

# ---- model sizes (toy 1x16x16 Bernoulli images) ----
B, C, H, W = 2, 1, 16, 16
D = C * H * W          # 256
HID = 128
ZDIM = 32
ZK_W = 128             # lane-dense combined [z | kl | pad] output width (full vreg)


def vae_kernel(x_ref, eps_ref,
               w1_ref, b1_ref,
               wmlv_ref, bmlv_ref,
               w3_ref, b3_ref,
               w4_ref, b4_ref,
               zk_ref, probs_ref, nll_ref):
    x_bf16 = x_ref[...]                                       # [TB, D] bf16 (half-width stream)

    # ---------------- encoder ----------------
    h = jnp.dot(x_bf16, w1_ref[...],
                preferred_element_type=jnp.float32) + b1_ref[...]
    h = jnp.maximum(h, 0.0)                                   # ReLU

    # fused mu|logvar head: single [HID, 2*ZDIM] matmul
    mlv = jnp.dot(h.astype(jnp.bfloat16), wmlv_ref[...],
                  preferred_element_type=jnp.float32) + bmlv_ref[...]

    # transcendental / square on the packed 64-wide slab, then slice
    half_exp = jnp.exp(0.5 * mlv)                             # 2nd half = std = exp(0.5*logvar)
    sq = mlv * mlv                                            # 1st half = mu^2
    mu = mlv[:, :ZDIM]
    logvar = mlv[:, ZDIM:]
    std = half_exp[:, ZDIM:]

    z = mu + std * eps_ref[...]                               # reparameterized sample
    # KL(N(mu, std) || N(0,1)); exp(logvar) == std*std (one fewer EUP exp)
    kl = 0.5 * (sq[:, :ZDIM] + std * std - 1.0 - logvar)

    # lane-dense combined output slab [TB, 128] = [z | kl | zeros]; single unmasked store
    pad = jnp.zeros((z.shape[0], ZK_W - 2 * ZDIM), jnp.float32)
    zk_ref[...] = jnp.concatenate([z, kl, pad], axis=-1)

    # ---------------- decoder ----------------
    hd = jnp.dot(z.astype(jnp.bfloat16), w3_ref[...],
                 preferred_element_type=jnp.float32) + b3_ref[...]
    hd = jnp.maximum(hd, 0.0)                                 # ReLU

    logits = jnp.dot(hd.astype(jnp.bfloat16), w4_ref[...],
                     preferred_element_type=jnp.float32) + b4_ref[...]

    # shared transcendental for sigmoid + NLL
    e = jnp.exp(-jnp.abs(logits))
    r = pl.reciprocal(1.0 + e, approx=True)                   # EUP approximate reciprocal
    probs = jnp.where(logits >= 0.0, r, e * r)                # two-sided stable sigmoid
    probs_ref[...] = jnp.minimum(probs, 1.0).astype(probs_ref.dtype)   # bf16 store

    # stable Bernoulli NLL; upcast x only here (f32 accuracy for the loss term)
    x_f32 = x_bf16.astype(jnp.float32)
    nll_ref[...] = jnp.maximum(logits, 0.0) - x_f32 * logits + jnp.log1p(e)


def _choose_batch_tile(b):
    """Adaptive batch tile: minimal padding for small b, >=2 grid steps for medium b
    (megacore sharding on v7x), capped at 512 for large b (amortize step overhead)."""
    b8 = 8 * pl.cdiv(b, 8)                  # f32 sublane granularity
    if b8 <= 256:
        return b8                           # one small tile, no wasted rows
    if b8 <= 1024:
        return 8 * pl.cdiv(pl.cdiv(b8, 2), 8)   # two tiles -> both TensorCores busy
    return 512                              # large batch: big tiles, grid >= 2


@jax.jit
def vae_forward(x_nchw, eps, params):
    """x_nchw: [B, C, H, W] f32, eps: [B, ZDIM] f32. Returns (z, probs_x, kl_z, neg_logpx_z)."""
    b = x_nchw.shape[0]
    x_flat = x_nchw.reshape(b, -1).astype(jnp.bfloat16)       # bf16 input stream
    eps = eps.astype(jnp.float32)

    tb = _choose_batch_tile(b)
    b_pad = tb * pl.cdiv(b, tb)
    pad = b_pad - b
    if pad:
        x_flat = jnp.pad(x_flat, ((0, pad), (0, 0)))
        eps = jnp.pad(eps, ((0, pad), (0, 0)))

    grid = (b_pad // tb,)

    def batch_spec(width):
        return pl.BlockSpec((tb, width), lambda i: (i, 0))

    def resident_spec(shape):                       # same block every step -> stays in VMEM
        return pl.BlockSpec(shape, lambda i: (0, 0))

    in_specs = [
        batch_spec(D),                              # x   (bf16)
        batch_spec(ZDIM),                           # eps (f32)
        resident_spec((D, HID)),                    # w1   (bf16)
        resident_spec((1, HID)),                    # b1
        resident_spec((HID, 2 * ZDIM)),             # wmlv (bf16, fused mu|logvar)
        resident_spec((1, 2 * ZDIM)),               # bmlv
        resident_spec((ZDIM, HID)),                 # w3   (bf16)
        resident_spec((1, HID)),                    # b3
        resident_spec((HID, D)),                    # w4   (bf16)
        resident_spec((1, D)),                      # b4
    ]
    out_specs = (batch_spec(ZK_W), batch_spec(D), batch_spec(D))

    zk, probs, nll = pl.pallas_call(
        vae_kernel,
        out_shape=(
            jax.ShapeDtypeStruct((b_pad, ZK_W), jnp.float32),    # [z | kl | pad]
            jax.ShapeDtypeStruct((b_pad, D), jnp.bfloat16),      # probs_x (flat, bf16 stream)
            jax.ShapeDtypeStruct((b_pad, D), jnp.float32),       # neg_logpx_z (flat, f32)
        ),
        grid=grid,
        in_specs=in_specs,
        out_specs=out_specs,
        compiler_params=pltpu.CompilerParams(
            dimension_semantics=("parallel",)),
    )(x_flat, eps,
      params["w1"], params["b1"],
      params["wmlv"], params["bmlv"],
      params["w3"], params["b3"],
      params["w4"], params["b4"])

    z = zk[:b, :ZDIM]
    kl_z = zk[:b, ZDIM:2 * ZDIM]
    probs_x = probs[:b].astype(jnp.float32).reshape(x_nchw.shape)
    neg_logpx_z = nll[:b].reshape(x_nchw.shape)
    return z, probs_x, kl_z, neg_logpx_z


def init_params(key):
    """PyTorch-Linear-style init (uniform(-1/sqrt(fan_in), +)); weights stored bf16."""
    def linear(k, fan_in, fan_out):
        kw, kb = jax.random.split(k)
        bound = 1.0 / jnp.sqrt(jnp.float32(fan_in))
        w = jax.random.uniform(kw, (fan_in, fan_out), jnp.float32, -bound, bound)
        b = jax.random.uniform(kb, (1, fan_out), jnp.float32, -bound, bound)
        return w, b

    k1, k2, k3, k4, k5 = jax.random.split(key, 5)
    w1, b1 = linear(k1, D, HID)
    wmu, bmu = linear(k2, HID, ZDIM)
    wlv, blv = linear(k3, HID, ZDIM)
    w3, b3 = linear(k4, ZDIM, HID)
    w4, b4 = linear(k5, HID, D)

    # fuse mu / logvar heads into one weight / bias
    wmlv = jnp.concatenate([wmu, wlv], axis=1)
    bmlv = jnp.concatenate([bmu, blv], axis=1)

    bf16 = lambda t: t.astype(jnp.bfloat16)
    return dict(w1=bf16(w1), b1=b1,
                wmlv=bf16(wmlv), bmlv=bmlv,
                w3=bf16(w3), b3=b3,
                w4=bf16(w4), b4=b4)


if __name__ == "__main__":
    key = jax.random.PRNGKey(0)
    k_x, k_eps, k_p = jax.random.split(key, 3)

    # Bernoulli-style input in [0, 1]; eps supplied externally (reparameterization noise)
    x = jax.random.uniform(k_x, (B, C, H, W), jnp.float32)
    eps = jax.random.normal(k_eps, (B, ZDIM), jnp.float32)
    params = init_params(k_p)

    z, probs_x, kl_z, neg_logpx_z = vae_forward(x, eps, params)
    jax.block_until_ready((z, probs_x, kl_z, neg_logpx_z))

    assert z.shape == (B, ZDIM)
    assert probs_x.shape == (B, C, H, W)
    assert kl_z.shape == (B, ZDIM)
    assert neg_logpx_z.shape == (B, C, H, W)
    assert bool(jnp.all(jnp.isfinite(z)))
    assert bool(jnp.all(jnp.isfinite(kl_z)))
    assert bool(jnp.all((probs_x >= 0.0) & (probs_x <= 1.0)))
    assert bool(jnp.all(kl_z >= -1e-4))          # KL >= 0 up to fp rounding
    assert bool(jnp.all(neg_logpx_z >= -1e-6))

    # TODO(synk): get_IS_estimate (importance-sampled LL) is not part of forward(); not implemented.
    print("KERNEL_OK")
</pallas_src>

<mosaic_0001>
module attributes {stable_mosaic.version = 11 : i64} {
  func.func @vae_kernel(%arg0: i32, %arg1: memref<8x256xbf16, #tpu.memory_space<vmem>>, %arg2: memref<8x32xf32, #tpu.memory_space<vmem>>, %arg3: memref<256x128xbf16, #tpu.memory_space<vmem>>, %arg4: memref<1x128xf32, #tpu.memory_space<vmem>>, %arg5: memref<128x64xbf16, #tpu.memory_space<vmem>>, %arg6: memref<1x64xf32, #tpu.memory_space<vmem>>, %arg7: memref<32x128xbf16, #tpu.memory_space<vmem>>, %arg8: memref<1x128xf32, #tpu.memory_space<vmem>>, %arg9: memref<128x256xbf16, #tpu.memory_space<vmem>>, %arg10: memref<1x256xf32, #tpu.memory_space<vmem>>, %arg11: memref<8x128xf32, #tpu.memory_space<vmem>>, %arg12: memref<8x256xbf16, #tpu.memory_space<vmem>>, %arg13: memref<8x256xf32, #tpu.memory_space<vmem>>) attributes {dimension_semantics = [#tpu.dimension_semantics<parallel>], iteration_bounds = array<i64: 1>, scalar_prefetch = 0 : i64, scratch_operands = 0 : i64, tpu.core_type = #tpu.core_type<tc>, window_params = [{transform_indices = @transform_0, window_bounds = array<i64: 8, 256>}, {transform_indices = @transform_1, window_bounds = array<i64: 8, 32>}, {pipeline_mode = #tpu.pipeline_mode<synchronous>, transform_indices = @transform_2, window_bounds = array<i64: 256, 128>}, {pipeline_mode = #tpu.pipeline_mode<synchronous>, transform_indices = @transform_3, window_bounds = array<i64: 1, 128>}, {pipeline_mode = #tpu.pipeline_mode<synchronous>, transform_indices = @transform_4, window_bounds = array<i64: 128, 64>}, {pipeline_mode = #tpu.pipeline_mode<synchronous>, transform_indices = @transform_5, window_bounds = array<i64: 1, 64>}, {pipeline_mode = #tpu.pipeline_mode<synchronous>, transform_indices = @transform_6, window_bounds = array<i64: 32, 128>}, {pipeline_mode = #tpu.pipeline_mode<synchronous>, transform_indices = @transform_7, window_bounds = array<i64: 1, 128>}, {pipeline_mode = #tpu.pipeline_mode<synchronous>, transform_indices = @transform_8, window_bounds = array<i64: 128, 256>}, {pipeline_mode = #tpu.pipeline_mode<synchronous>, transform_indices = @transform_9, window_bounds = array<i64: 1, 256>}, {transform_indices = @transform_10, window_bounds = array<i64: 8, 128>}, {transform_indices = @transform_11, window_bounds = array<i64: 8, 256>}, {transform_indices = @transform_12, window_bounds = array<i64: 8, 256>}]} {
    %c0 = arith.constant 0 : index
    %c0_0 = arith.constant 0 : index
    %0 = vector.load %arg1[%c0, %c0_0] : memref<8x256xbf16, #tpu.memory_space<vmem>>, vector<8x256xbf16>
    %c0_1 = arith.constant 0 : index
    %c0_2 = arith.constant 0 : index
    %1 = vector.load %arg3[%c0_1, %c0_2] : memref<256x128xbf16, #tpu.memory_space<vmem>>, vector<256x128xbf16>
    %cst = arith.constant dense<0.000000e+00> : vector<8x128xf32>
    %2 = tpu.matmul %0, %1, %cst {dimension_numbers = #tpu.dot_dimension_numbers<[1], [0], [0], [1], [0, 0, 1, 1], [], []>} : vector<8x256xbf16>, vector<256x128xbf16>, vector<8x128xf32> -> vector<8x128xf32>
    %c0_3 = arith.constant 0 : index
    %c0_4 = arith.constant 0 : index
    %3 = vector.load %arg4[%c0_3, %c0_4] : memref<1x128xf32, #tpu.memory_space<vmem>>, vector<1x128xf32>
    %4 = vector.broadcast %3 : vector<1x128xf32> to vector<8x128xf32>
    %5 = arith.addf %2, %4 : vector<8x128xf32>
    %cst_5 = arith.constant 0.000000e+00 : f32
    %6 = vector.broadcast %cst_5 : f32 to vector<8x128xf32>
    %7 = arith.maximumf %5, %6 : vector<8x128xf32>
    %8 = arith.truncf %7 : vector<8x128xf32> to vector<8x128xbf16>
    %c0_6 = arith.constant 0 : index
    %c0_7 = arith.constant 0 : index
    %9 = vector.load %arg5[%c0_6, %c0_7] : memref<128x64xbf16, #tpu.memory_space<vmem>>, vector<128x64xbf16>
    %cst_8 = arith.constant dense<0.000000e+00> : vector<8x64xf32>
    %10 = tpu.matmul %8, %9, %cst_8 {dimension_numbers = #tpu.dot_dimension_numbers<[1], [0], [0], [1], [0, 0, 1, 1], [], []>} : vector<8x128xbf16>, vector<128x64xbf16>, vector<8x64xf32> -> vector<8x64xf32>
    %c0_9 = arith.constant 0 : index
    %c0_10 = arith.constant 0 : index
    %11 = vector.load %arg6[%c0_9, %c0_10] : memref<1x64xf32, #tpu.memory_space<vmem>>, vector<1x64xf32>
    %12 = vector.broadcast %11 : vector<1x64xf32> to vector<8x64xf32>
    %13 = arith.addf %10, %12 : vector<8x64xf32>
    %cst_11 = arith.constant 5.000000e-01 : f32
    %14 = vector.broadcast %cst_11 : f32 to vector<8x64xf32>
    %15 = arith.mulf %14, %13 : vector<8x64xf32>
    %16 = math.exp %15 : vector<8x64xf32>
    %17 = arith.mulf %13, %13 : vector<8x64xf32>
    %18 = vector.extract_strided_slice %13 {offsets = [0, 0], sizes = [8, 32], strides = [1, 1]} : vector<8x64xf32> to vector<8x32xf32>
    %19 = vector.extract_strided_slice %13 {offsets = [0, 32], sizes = [8, 32], strides = [1, 1]} : vector<8x64xf32> to vector<8x32xf32>
    %20 = vector.extract_strided_slice %16 {offsets = [0, 32], sizes = [8, 32], strides = [1, 1]} : vector<8x64xf32> to vector<8x32xf32>
    %c0_12 = arith.constant 0 : index
    %c0_13 = arith.constant 0 : index
    %21 = vector.load %arg2[%c0_12, %c0_13] : memref<8x32xf32, #tpu.memory_space<vmem>>, vector<8x32xf32>
    %22 = arith.mulf %20, %21 : vector<8x32xf32>
    %23 = arith.addf %18, %22 : vector<8x32xf32>
    %24 = vector.extract_strided_slice %17 {offsets = [0, 0], sizes = [8, 32], strides = [1, 1]} : vector<8x64xf32> to vector<8x32xf32>
    %25 = arith.mulf %20, %20 : vector<8x32xf32>
    %26 = arith.addf %24, %25 : vector<8x32xf32>
    %cst_14 = arith.constant 1.000000e+00 : f32
    %27 = vector.broadcast %cst_14 : f32 to vector<8x32xf32>
    %28 = arith.subf %26, %27 : vector<8x32xf32>
    %29 = arith.subf %28, %19 : vector<8x32xf32>
    %cst_15 = arith.constant 5.000000e-01 : f32
    %30 = vector.broadcast %cst_15 : f32 to vector<8x32xf32>
    %31 = arith.mulf %30, %29 : vector<8x32xf32>
    %cst_16 = arith.constant 0.000000e+00 : f32
    %32 = vector.broadcast %cst_16 : f32 to vector<8x64xf32>
    %33 = tpu.concatenate %23, %31, %32 in 1 : vector<8x32xf32>, vector<8x32xf32>, vector<8x64xf32> -> vector<8x128xf32>
    %c0_17 = arith.constant 0 : index
    %c0_18 = arith.constant 0 : index
    %34 = vector.load %arg11[%c0_17, %c0_18] : memref<8x128xf32, #tpu.memory_space<vmem>>, vector<8x128xf32>
    tpu.vector_store %arg11[%c0_17, %c0_18], %33 {strides = array<i32>} : memref<8x128xf32, #tpu.memory_space<vmem>>, vector<8x128xf32>,
    %35 = arith.truncf %23 : vector<8x32xf32> to vector<8x32xbf16>
    %c0_19 = arith.constant 0 : index
    %c0_20 = arith.constant 0 : index
    %36 = vector.load %arg7[%c0_19, %c0_20] : memref<32x128xbf16, #tpu.memory_space<vmem>>, vector<32x128xbf16>
    %cst_21 = arith.constant dense<0.000000e+00> : vector<8x128xf32>
    %37 = tpu.matmul %35, %36, %cst_21 {dimension_numbers = #tpu.dot_dimension_numbers<[1], [0], [0], [1], [0, 0, 1, 1], [], []>} : vector<8x32xbf16>, vector<32x128xbf16>, vector<8x128xf32> -> vector<8x128xf32>
    %c0_22 = arith.constant 0 : index
    %c0_23 = arith.constant 0 : index
    %38 = vector.load %arg8[%c0_22, %c0_23] : memref<1x128xf32, #tpu.memory_space<vmem>>, vector<1x128xf32>
    %39 = vector.broadcast %38 : vector<1x128xf32> to vector<8x128xf32>
    %40 = arith.addf %37, %39 : vector<8x128xf32>
    %cst_24 = arith.constant 0.000000e+00 : f32
    %41 = vector.broadcast %cst_24 : f32 to vector<8x128xf32>
    %42 = arith.maximumf %40, %41 : vector<8x128xf32>
    %43 = arith.truncf %42 : vector<8x128xf32> to vector<8x128xbf16>
    %c0_25 = arith.constant 0 : index
    %c0_26 = arith.constant 0 : index
    %44 = vector.load %arg9[%c0_25, %c0_26] : memref<128x256xbf16, #tpu.memory_space<vmem>>, vector<128x256xbf16>
    %cst_27 = arith.constant dense<0.000000e+00> : vector<8x256xf32>
    %45 = tpu.matmul %43, %44, %cst_27 {dimension_numbers = #tpu.dot_dimension_numbers<[1], [0], [0], [1], [0, 0, 1, 1], [], []>} : vector<8x128xbf16>, vector<128x256xbf16>, vector<8x256xf32> -> vector<8x256xf32>
    %c0_28 = arith.constant 0 : index
    %c0_29 = arith.constant 0 : index
    %46 = vector.load %arg10[%c0_28, %c0_29] : memref<1x256xf32, #tpu.memory_space<vmem>>, vector<1x256xf32>
    %47 = vector.broadcast %46 : vector<1x256xf32> to vector<8x256xf32>
    %48 = arith.addf %45, %47 : vector<8x256xf32>
    %49 = math.absf %48 : vector<8x256xf32>
    %cst_30 = arith.constant 0.000000e+00 : f32
    %50 = vector.broadcast %cst_30 : f32 to vector<8x256xf32>
    %51 = arith.subf %50, %49 : vector<8x256xf32>
    %52 = math.exp %51 : vector<8x256xf32>
    %cst_31 = arith.constant 1.000000e+00 : f32
    %53 = vector.broadcast %cst_31 : f32 to vector<8x256xf32>
    %54 = arith.addf %53, %52 : vector<8x256xf32>
    %55 = tpu.reciprocal %54 {approx = true} : vector<8x256xf32> -> vector<8x256xf32>
    %cst_32 = arith.constant 0.000000e+00 : f32
    %56 = vector.broadcast %cst_32 : f32 to vector<8x256xf32>
    %57 = arith.cmpf oge, %48, %56 : vector<8x256xf32>
    %58 = arith.mulf %52, %55 : vector<8x256xf32>
    %59 = arith.select %57, %55, %58 : vector<8x256xi1>, vector<8x256xf32>
    %cst_33 = arith.constant 1.000000e+00 : f32
    %60 = vector.broadcast %cst_33 : f32 to vector<8x256xf32>
    %61 = arith.minimumf %59, %60 : vector<8x256xf32>
    %62 = arith.truncf %61 : vector<8x256xf32> to vector<8x256xbf16>
    %c0_34 = arith.constant 0 : index
    %c0_35 = arith.constant 0 : index
    %63 = vector.load %arg12[%c0_34, %c0_35] : memref<8x256xbf16, #tpu.memory_space<vmem>>, vector<8x256xbf16>
    tpu.vector_store %arg12[%c0_34, %c0_35], %62 {strides = array<i32>} : memref<8x256xbf16, #tpu.memory_space<vmem>>, vector<8x256xbf16>,
    %64 = arith.extf %0 : vector<8x256xbf16> to vector<8x256xf32>
    %cst_36 = arith.constant 0.000000e+00 : f32
    %65 = vector.broadcast %cst_36 : f32 to vector<8x256xf32>
    %66 = arith.maximumf %48, %65 : vector<8x256xf32>
    %67 = arith.mulf %64, %48 : vector<8x256xf32>
    %68 = arith.subf %66, %67 : vector<8x256xf32>
    %69 = math.log1p %52 : vector<8x256xf32>
    %70 = arith.addf %68, %69 : vector<8x256xf32>
    %c0_37 = arith.constant 0 : index
    %c0_38 = arith.constant 0 : index
    %71 = vector.load %arg13[%c0_37, %c0_38] : memref<8x256xf32, #tpu.memory_space<vmem>>, vector<8x256xf32>
    tpu.vector_store %arg13[%c0_37, %c0_38], %70 {strides = array<i32>} : memref<8x256xf32, #tpu.memory_space<vmem>>, vector<8x256xf32>,
    return
  }
  func.func @transform_0(%arg0: i32) -> (i32, i32) {
    %c0_i32 = arith.constant 0 : i32
    %c0_i32_0 = arith.constant 0 : i32
    return %arg0, %c0_i32 : i32, i32
  }
  func.func @transform_1(%arg0: i32) -> (i32, i32) {
    %c0_i32 = arith.constant 0 : i32
    %c0_i32_0 = arith.constant 0 : i32
    return %arg0, %c0_i32 : i32, i32
  }
  func.func @transform_2(%arg0: i32) -> (i32, i32) {
    %c0_i32 = arith.constant 0 : i32
    %c0_i32_0 = arith.constant 0 : i32
    %c0_i32_1 = arith.constant 0 : i32
    return %c0_i32, %c0_i32_0 : i32, i32
  }
  func.func @transform_3(%arg0: i32) -> (i32, i32) {
    %c0_i32 = arith.constant 0 : i32
    %c0_i32_0 = arith.constant 0 : i32
    %c0_i32_1 = arith.constant 0 : i32
    return %c0_i32, %c0_i32_0 : i32, i32
  }
  func.func @transform_4(%arg0: i32) -> (i32, i32) {
    %c0_i32 = arith.constant 0 : i32
    %c0_i32_0 = arith.constant 0 : i32
    %c0_i32_1 = arith.constant 0 : i32
    return %c0_i32, %c0_i32_0 : i32, i32
  }
  func.func @transform_5(%arg0: i32) -> (i32, i32) {
    %c0_i32 = arith.constant 0 : i32
    %c0_i32_0 = arith.constant 0 : i32
    %c0_i32_1 = arith.constant 0 : i32
    return %c0_i32, %c0_i32_0 : i32, i32
  }
  func.func @transform_6(%arg0: i32) -> (i32, i32) {
    %c0_i32 = arith.constant 0 : i32
    %c0_i32_0 = arith.constant 0 : i32
    %c0_i32_1 = arith.constant 0 : i32
    return %c0_i32, %c0_i32_0 : i32, i32
  }
  func.func @transform_7(%arg0: i32) -> (i32, i32) {
    %c0_i32 = arith.constant 0 : i32
    %c0_i32_0 = arith.constant 0 : i32
    %c0_i32_1 = arith.constant 0 : i32
    return %c0_i32, %c0_i32_0 : i32, i32
  }
  func.func @transform_8(%arg0: i32) -> (i32, i32) {
    %c0_i32 = arith.constant 0 : i32
    %c0_i32_0 = arith.constant 0 : i32
    %c0_i32_1 = arith.constant 0 : i32
    return %c0_i32, %c0_i32_0 : i32, i32
  }
  func.func @transform_9(%arg0: i32) -> (i32, i32) {
    %c0_i32 = arith.constant 0 : i32
    %c0_i32_0 = arith.constant 0 : i32
    %c0_i32_1 = arith.constant 0 : i32
    return %c0_i32, %c0_i32_0 : i32, i32
  }
  func.func @transform_10(%arg0: i32) -> (i32, i32) {
    %c0_i32 = arith.constant 0 : i32
    %c0_i32_0 = arith.constant 0 : i32
    return %arg0, %c0_i32 : i32, i32
  }
  func.func @transform_11(%arg0: i32) -> (i32, i32) {
    %c0_i32 = arith.constant 0 : i32
    %c0_i32_0 = arith.constant 0 : i32
    return %arg0, %c0_i32 : i32, i32
  }
  func.func @transform_12(%arg0: i32) -> (i32, i32) {
    %c0_i32 = arith.constant 0 : i32
    %c0_i32_0 = arith.constant 0 : i32
    return %arg0, %c0_i32 : i32, i32
  }
}

</mosaic_0001>

<llo_original>
// kernel: vae_forward.1
$region0: #{vae_forward.1}
  #allocation0 [shape = 'u32[]', space=smem, size = 0x4, offset = 0x4, fixed_abs, tag = 'smem constant byte address 0x4 - core index']
  #allocation1 [shape = 'u32[144,128]{1,0:T(1,128)}', space=vmem, size = 0x12000, scoped, tag = 'internal scratch']
  %s0 = inlined_call_operand.vmem [shape: bf16[8,256], index: 0, kind: input, shape index: {}]
  %s1 = inlined_call_operand.vmem [shape: f32[8,32], index: 1, kind: input, shape index: {}]
  %s2 = inlined_call_operand.vmem [shape: bf16[256,128], index: 2, kind: input, shape index: {}]
  %s3 = inlined_call_operand.vmem [shape: f32[1,128], index: 3, kind: input, shape index: {}]
  %s4 = inlined_call_operand.vmem [shape: bf16[128,64], index: 4, kind: input, shape index: {}]
  %s5 = inlined_call_operand.vmem [shape: f32[1,64], index: 5, kind: input, shape index: {}]
  %s6 = inlined_call_operand.vmem [shape: bf16[32,128], index: 6, kind: input, shape index: {}]
  %s7 = inlined_call_operand.vmem [shape: f32[1,128], index: 7, kind: input, shape index: {}]
  %s8 = inlined_call_operand.hbm [shape: bf16[128,256], index: 8, kind: input, shape index: {}]
  %s9 = inlined_call_operand.vmem [shape: f32[1,256], index: 9, kind: input, shape index: {}]
  %s10 = inlined_call_operand.vmem [shape: f32[8,128], index: 10, kind: output, shape index: {0}]
  %s11 = inlined_call_operand.vmem [shape: bf16[8,256], index: 11, kind: output, shape index: {1}]
  %s12 = inlined_call_operand.vmem [shape: f32[8,256], index: 12, kind: output, shape index: {2}]
  %13 = xla_tuple %s10, %s11, %s12
  %s14 = sld [smem:[#allocation0]]
  $region70: #{vae_forward.1} parent=0
    _
  %s16 = ssub.s32 1, %s14
  %s17 = scalar_select 0, %s16, %s14
  $region1: #{vae_forward.1} parent=0
    #allocation2 [shape = 'u8[65536]{0}', space=vmem, size = 0x10000, scoped, tag = 'input window, operand 8, single buffered']
    #allocation3 [shape = 's32[1]{0}', space=sflag, size = 0x4, scoped, tag = 'scoped memory for vae_forward.1']
    %18 = vsyncpa [#allocation3], 0
    // Predicated region
    $region2: #{vae_forward.1} parent=1 // pred_check
      _
    $region3: #{vae_forward.1} parent=1 // pred_check_branch
      %20 = sbr.rel (0) target = $region5
    $region4: #{vae_forward.1} parent=1 // pred_region
      _
    $region5: #{vae_forward.1} parent=1 // pred_fallthru
      _
    // Predicated region
    $region6: #{vae_forward.1} parent=1 // pred_check
      _
    $region7: #{vae_forward.1} parent=1 // pred_check_branch
      %22 = sbr.rel (0) target = $region9
    $region8: #{vae_forward.1} parent=1 // pred_region
      _
    $region9: #{vae_forward.1} parent=1 // pred_fallthru
      _
    // Predicated region
    $region10: #{vae_forward.1} parent=1 // pred_check
      _
    $region11: #{vae_forward.1} parent=1 // pred_check_branch
      %24 = sbr.rel (0) target = $region13
    $region12: #{vae_forward.1} parent=1 // pred_region
      _
    $region13: #{vae_forward.1} parent=1 // pred_fallthru
      _
    // Predicated region
    $region14: #{vae_forward.1} parent=1 // pred_check
      _
    $region15: #{vae_forward.1} parent=1 // pred_check_branch
      %26 = sbr.rel (0) target = $region17
    $region16: #{vae_forward.1} parent=1 // pred_region
      _
    $region17: #{vae_forward.1} parent=1 // pred_fallthru
      _
    // Predicated region
    $region18: #{vae_forward.1} parent=1 // pred_check
      _
    $region19: #{vae_forward.1} parent=1 // pred_check_branch
      %28 = sbr.rel (0) target = $region21
    $region20: #{vae_forward.1} parent=1 // pred_region
      _
    $region21: #{vae_forward.1} parent=1 // pred_fallthru
      _
    // Predicated region
    $region22: #{vae_forward.1} parent=1 // pred_check
      _
    $region23: #{vae_forward.1} parent=1 // pred_check_branch
      %30 = sbr.rel (0) target = $region25
    $region24: #{vae_forward.1} parent=1 // pred_region
      _
    $region25: #{vae_forward.1} parent=1 // pred_fallthru
      _
    // Predicated region
    $region26: #{vae_forward.1} parent=1 // pred_check
      _
    $region27: #{vae_forward.1} parent=1 // pred_check_branch
      %32 = sbr.rel (0) target = $region29
    $region28: #{vae_forward.1} parent=1 // pred_region
      _
    $region29: #{vae_forward.1} parent=1 // pred_fallthru
      _
    // Predicated region
    $region30: #{vae_forward.1} parent=1 // pred_check
      _
    $region31: #{vae_forward.1} parent=1 // pred_check_branch
      %34 = sbr.rel (0) target = $region33
    $region32: #{vae_forward.1} parent=1 // pred_region
      _
    $region33: #{vae_forward.1} parent=1 // pred_fallthru
      _
    // Predicated region
    $region34: #{vae_forward.1} parent=1 // pred_check
      _
    $region35: #{vae_forward.1} parent=1 // pred_check_branch
      %36 = sbr.rel (0) target = $region37
    $region36: #{vae_forward.1} parent=1 // pred_region
      %s38 = ssub.s32 2048, 2048
      %39 = vsyncadd [#allocation3], %s38
      %s40 = sshll.u32 [#allocation2], 4
      %s41 = int_to_ptr.vmem [resolvable:$true] %s40
      %46 = dma.hbm_to_vmem [thread:$0]  %s8, 2048, %s41, [#allocation3], 128, 128, 8
    $region37: #{vae_forward.1} parent=1 // pred_fallthru
      _
    // Predicated region
    $region38: #{vae_forward.1} parent=1 // pred_check
      _
    $region39: #{vae_forward.1} parent=1 // pred_check_branch
      %48 = sbr.rel (0) target = $region41
    $region40: #{vae_forward.1} parent=1 // pred_region
      _
    $region41: #{vae_forward.1} parent=1 // pred_fallthru
      _
    // Predicated region
    $region42: #{vae_forward.1} parent=1 // pred_check
      _
    $region43: #{vae_forward.1} parent=1 // pred_check_branch
      %50 = sbr.rel (0) target = $region45
    $region44: #{vae_forward.1} parent=1 // pred_region
      %51 = dma.done [#allocation3], 2048
    $region45: #{vae_forward.1} parent=1 // pred_fallthru
      _
    %v53 = vld [vmem:[%s0] sm:$0xff]
    %v54 = vld [vmem:[%s2] sm:$0xf]
    %v55 = vld [vmem:[%s2 + $0x4] sm:$0xf]
    %v56 = vld [vmem:[%s2 + $0x8] sm:$0xf]
    %v57 = vld [vmem:[%s2 + $0xc] sm:$0xf]
    %v58 = vld [vmem:[%s2 + $0x10] sm:$0xf]
    %v59 = vld [vmem:[%s2 + $0x14] sm:$0xf]
    %v60 = vld [vmem:[%s2 + $0x18] sm:$0xf]
    %v61 = vld [vmem:[%s2 + $0x1c] sm:$0xf]
    %v62 = vld [vmem:[%s2 + $0x20] sm:$0xf]
    %v63 = vld [vmem:[%s2 + $0x24] sm:$0xf]
    %v64 = vld [vmem:[%s2 + $0x28] sm:$0xf]
    %v65 = vld [vmem:[%s2 + $0x2c] sm:$0xf]
    %v66 = vld [vmem:[%s2 + $0x30] sm:$0xf]
    %v67 = vld [vmem:[%s2 + $0x34] sm:$0xf]
    %v68 = vld [vmem:[%s2 + $0x38] sm:$0xf]
    %v69 = vld [vmem:[%s2 + $0x3c] sm:$0xf]
    %v70 = vld [vmem:[%s2 + $0x40] sm:$0xf]
    %v71 = vld [vmem:[%s2 + $0x44] sm:$0xf]
    %v72 = vld [vmem:[%s2 + $0x48] sm:$0xf]
    %v73 = vld [vmem:[%s2 + $0x4c] sm:$0xf]
    %v74 = vld [vmem:[%s2 + $0x50] sm:$0xf]
    %v75 = vld [vmem:[%s2 + $0x54] sm:$0xf]
    %v76 = vld [vmem:[%s2 + $0x58] sm:$0xf]
    %v77 = vld [vmem:[%s2 + $0x5c] sm:$0xf]
    %v78 = vld [vmem:[%s2 + $0x60] sm:$0xf]
    %v79 = vld [vmem:[%s2 + $0x64] sm:$0xf]
    %v80 = vld [vmem:[%s2 + $0x68] sm:$0xf]
    %v81 = vld [vmem:[%s2 + $0x6c] sm:$0xf]
    %v82 = vld [vmem:[%s2 + $0x70] sm:$0xf]
    %v83 = vld [vmem:[%s2 + $0x74] sm:$0xf]
    %v84 = vld [vmem:[%s2 + $0x78] sm:$0xf]
    %v85 = vld [vmem:[%s2 + $0x7c] sm:$0xf]
    %v86 = vld [vmem:[%s3] sm:$0x1]
    %v88 = vlaneseq
    %v89 = vshrl.u32 %v88, 7
    %v90 = vsub.s32 0, %v89
    %v91 = vrot.slane %v86, %v90
    %v94 = vunpack.c.l.b16 %v53
    %v95 = vunpack.c.h.b16 %v53
    %v96 = vpack.c.b16 %v94, %v94
    %v97 = vpack.c.b16 %v95, %v95
    %v132 = vunpack.c.l.b16 %v54
    %v133 = vunpack.c.l.b16 %v55
    %v134 = vunpack.c.l.b16 %v56
    %v135 = vunpack.c.l.b16 %v57
    %v136 = vunpack.c.l.b16 %v58
    %v137 = vunpack.c.l.b16 %v59
    %v138 = vunpack.c.l.b16 %v60
    %v139 = vunpack.c.l.b16 %v61
    %v140 = vunpack.c.l.b16 %v62
    %v141 = vunpack.c.l.b16 %v63
    %v142 = vunpack.c.l.b16 %v64
    %v143 = vunpack.c.l.b16 %v65
    %v144 = vunpack.c.l.b16 %v66
    %v145 = vunpack.c.l.b16 %v67
    %v146 = vunpack.c.l.b16 %v68
    %v147 = vunpack.c.l.b16 %v69
    %v148 = vunpack.c.l.b16 %v70
    %v149 = vunpack.c.l.b16 %v71
    %v150 = vunpack.c.l.b16 %v72
    %v151 = vunpack.c.l.b16 %v73
    %v152 = vunpack.c.l.b16 %v74
    %v153 = vunpack.c.l.b16 %v75
    %v154 = vunpack.c.l.b16 %v76
    %v155 = vunpack.c.l.b16 %v77
    %v156 = vunpack.c.l.b16 %v78
    %v157 = vunpack.c.l.b16 %v79
    %v158 = vunpack.c.l.b16 %v80
    %v159 = vunpack.c.l.b16 %v81
    %v160 = vunpack.c.l.b16 %v82
    %v161 = vunpack.c.l.b16 %v83
    %v162 = vunpack.c.l.b16 %v84
    %v163 = vunpack.c.l.b16 %v85
    %v164 = vpack.c.b16 %v133, %v132
    %v165 = vpack.c.b16 %v135, %v134
    %v166 = vpack.c.b16 %v137, %v136
    %v167 = vpack.c.b16 %v139, %v138
    %v168 = vpack.c.b16 %v141, %v140
    %v169 = vpack.c.b16 %v143, %v142
    %v170 = vpack.c.b16 %v145, %v144
    %v171 = vpack.c.b16 %v147, %v146
    %v172 = vpack.c.b16 %v149, %v148
    %v173 = vpack.c.b16 %v151, %v150
    %v174 = vpack.c.b16 %v153, %v152
    %v175 = vpack.c.b16 %v155, %v154
    %v176 = vpack.c.b16 %v157, %v156
    %v177 = vpack.c.b16 %v159, %v158
    %v178 = vpack.c.b16 %v161, %v160
    %v179 = vpack.c.b16 %v163, %v162
    %196 = vmatprep.subr.bf16.mxu0 0
    %197 = vmatpush1.bf16.msra.mxu0 %v164
    %198 = vmatprep.subr.bf16.mxu0 0
    %199 = vmatpush1.bf16.msra.mxu0 %v165
    %200 = vmatprep.subr.bf16.mxu0 0
    %201 = vmatpush1.bf16.msra.mxu0 %v166
    %202 = vmatprep.subr.bf16.mxu0 0
    %203 = vmatpush1.bf16.msra.mxu0 %v167
    %204 = vmatprep.subr.bf16.mxu0 0
    %205 = vmatpush1.bf16.msra.mxu0 %v168
    %206 = vmatprep.subr.bf16.mxu0 0
    %207 = vmatpush1.bf16.msra.mxu0 %v169
    %208 = vmatprep.subr.bf16.mxu0 0
    %209 = vmatpush1.bf16.msra.mxu0 %v170
    %210 = vmatprep.subr.bf16.mxu0 0
    %211 = vmatpush1.bf16.msra.mxu0 %v171
    %212 = vmatprep.subr.bf16.mxu0 0
    %213 = vmatpush1.bf16.msra.mxu0 %v172
    %214 = vmatprep.subr.bf16.mxu0 0
    %215 = vmatpush1.bf16.msra.mxu0 %v173
    %216 = vmatprep.subr.bf16.mxu0 0
    %217 = vmatpush1.bf16.msra.mxu0 %v174
    %218 = vmatprep.subr.bf16.mxu0 0
    %219 = vmatpush1.bf16.msra.mxu0 %v175
    %220 = vmatprep.subr.bf16.mxu0 0
    %221 = vmatpush1.bf16.msra.mxu0 %v176
    %222 = vmatprep.subr.bf16.mxu0 0
    %223 = vmatpush1.bf16.msra.mxu0 %v177
    %224 = vmatprep.subr.bf16.mxu0 0
    %225 = vmatpush1.bf16.msra.mxu0 %v178
    %226 = vmatprep.subr.bf16.mxu0 0
    %227 = vmatpush1.bf16.msra.mxu0 %v179
    %228 = vmatprep.mubr.bf16.mxu0 %v97
    %229 = vmatmul.mubr.bf16.gmra.mrb[0].mxu0 %v96
    %v230 = vpop.f32.mrb[0].mxu0
    %v231 = vadd.f32 %v91, %v230
    %v232 = vpop.f32.mrb[0].mxu0
    %v233 = vpop.f32.mrb[0].mxu0
    %v234 = vpop.f32.mrb[0].mxu0
    %235 = vdwg.mxu0
    %v236 = vmax.f32 %v231, 0.0
    %v237 = vpack.c.bf16 %v236, %v236
    %v238 = vld [vmem:[%s4] sm:$0xf]
    %v239 = vld [vmem:[%s4 + $0x4] sm:$0xf]
    %v240 = vld [vmem:[%s4 + $0x8] sm:$0xf]
    %v241 = vld [vmem:[%s4 + $0xc] sm:$0xf]
    %v242 = vld [vmem:[%s4 + $0x10] sm:$0xf]
    %v243 = vld [vmem:[%s4 + $0x14] sm:$0xf]
    %v244 = vld [vmem:[%s4 + $0x18] sm:$0xf]
    %v245 = vld [vmem:[%s4 + $0x1c] sm:$0xf]
    %v246 = vld [vmem:[%s4 + $0x20] sm:$0xf]
    %v247 = vld [vmem:[%s4 + $0x24] sm:$0xf]
    %v248 = vld [vmem:[%s4 + $0x28] sm:$0xf]
    %v249 = vld [vmem:[%s4 + $0x2c] sm:$0xf]
    %v250 = vld [vmem:[%s4 + $0x30] sm:$0xf]
    %v251 = vld [vmem:[%s4 + $0x34] sm:$0xf]
    %v252 = vld [vmem:[%s4 + $0x38] sm:$0xf]
    %v253 = vld [vmem:[%s4 + $0x3c] sm:$0xf]
    %v254 = vld [vmem:[%s5] sm:$0x1]
    %v256 = vlaneseq
    %v257 = vshrl.u32 %v256, 7
    %v258 = vsub.s32 0, %v257
    %v259 = vrot.slane %v254, %v258
    %v277 = vunpack.c.l.b16 %v238
    %v278 = vunpack.c.l.b16 %v239
    %v279 = vunpack.c.l.b16 %v240
    %v280 = vunpack.c.l.b16 %v241
    %v281 = vunpack.c.l.b16 %v242
    %v282 = vunpack.c.l.b16 %v243
    %v283 = vunpack.c.l.b16 %v244
    %v284 = vunpack.c.l.b16 %v245
    %v285 = vunpack.c.l.b16 %v246
    %v286 = vunpack.c.l.b16 %v247
    %v287 = vunpack.c.l.b16 %v248
    %v288 = vunpack.c.l.b16 %v249
    %v289 = vunpack.c.l.b16 %v250
    %v290 = vunpack.c.l.b16 %v251
    %v291 = vunpack.c.l.b16 %v252
    %v292 = vunpack.c.l.b16 %v253
    %v293 = vpack.c.b16 %v278, %v277
    %v294 = vpack.c.b16 %v280, %v279
    %v295 = vpack.c.b16 %v282, %v281
    %v296 = vpack.c.b16 %v284, %v283
    %v297 = vpack.c.b16 %v286, %v285
    %v298 = vpack.c.b16 %v288, %v287
    %v299 = vpack.c.b16 %v290, %v289
    %v300 = vpack.c.b16 %v292, %v291
    %309 = vmatprep.subr.bf16.mxu0 0
    %310 = vmatpush1.bf16.msra.mxu0 %v293
    %311 = vmatprep.subr.bf16.mxu0 0
    %312 = vmatpush1.bf16.msra.mxu0 %v294
    %313 = vmatprep.subr.bf16.mxu0 0
    %314 = vmatpush1.bf16.msra.mxu0 %v295
    %315 = vmatprep.subr.bf16.mxu0 0
    %316 = vmatpush1.bf16.msra.mxu0 %v296
    %317 = vmatprep.subr.bf16.mxu0 0
    %318 = vmatpush1.bf16.msra.mxu0 %v297
    %319 = vmatprep.subr.bf16.mxu0 0
    %320 = vmatpush1.bf16.msra.mxu0 %v298
    %321 = vmatprep.subr.bf16.mxu0 0
    %322 = vmatpush1.bf16.msra.mxu0 %v299
    %323 = vmatprep.subr.bf16.mxu0 0
    %324 = vmatpush1.bf16.msra.mxu0 %v300
    %325 = vmatprep.subr.bf16.mxu0 0
    %326 = vmatpush1.bf16.msra.mxu0 0
    %327 = vmatprep.subr.bf16.mxu0 0
    %328 = vmatpush1.bf16.msra.mxu0 0
    %329 = vmatprep.subr.bf16.mxu0 0
    %330 = vmatpush1.bf16.msra.mxu0 0
    %331 = vmatprep.subr.bf16.mxu0 0
    %332 = vmatpush1.bf16.msra.mxu0 0
    %333 = vmatprep.subr.bf16.mxu0 0
    %334 = vmatpush1.bf16.msra.mxu0 0
    %335 = vmatprep.subr.bf16.mxu0 0
    %336 = vmatpush1.bf16.msra.mxu0 0
    %337 = vmatprep.subr.bf16.mxu0 0
    %338 = vmatpush1.bf16.msra.mxu0 0
    %339 = vmatprep.subr.bf16.mxu0 0
    %340 = vmatpush1.bf16.msra.mxu0 0
    %341 = vmatprep.mubr.bf16.mxu0 0
    %342 = vmatmul.mubr.bf16.gmra.mrb[0].mxu0 %v237
    %v343 = vpop.f32.mrb[0].mxu0
    %v344 = vadd.f32 %v259, %v343
    %v345 = vpop.f32.mrb[0].mxu0
    %v346 = vpop.f32.mrb[0].mxu0
    %v347 = vpop.f32.mrb[0].mxu0
    %348 = vdwg.mxu0
    %v349 = vmul.f32 %v344, 0.5
    %v350 = vmul.f32 %v349, 1.442695
    %v351 = vpow.pop %v350
    %v352 = vmul.f32 %v344, %v344
    %v353 = vld [vmem:[%s1] sm:$0xff]
    %355 = vrot.lane.b32.xlu0 %v353, 32
    %v356 = vpop.permute.xlu0 %355
    %v358 = vmul.f32 %v351, %v356
    %360 = vrot.lane.b32.xlu0 %v358, 96
    %v361 = vpop.permute.xlu0 %360
    %v363 = vadd.f32 %v344, %v361
    %v364 = vmul.f32 %v351, %v351
    %366 = vrot.lane.b32.xlu0 %v364, 96
    %v367 = vpop.permute.xlu0 %366
    %v369 = vadd.f32 %v352, %v367
    %v370 = vsub.f32 %v369, 1.0
    %372 = vrot.lane.b32.xlu0 %v344, 96
    %v373 = vpop.permute.xlu0 %372
    %v375 = vsub.f32 %v370, %v373
    %v376 = vmul.f32 %v375, 0.5
    %378 = vrot.lane.b32.xlu0 %v376, 32
    %v379 = vpop.permute.xlu0 %378
    %vm381 = vcmask 261120
    %v382 = vsel %vm381, %v363, %v379
    %vm383 = vcmask 523264
    %v384 = vsel %vm383, %v382, 0.0
    %385 = vst [vmem:[%s10] sm:$0xff] %v384
    %v386 = vpack.c.bf16 %v363, %v363
    %v387 = vld [vmem:[%s6] sm:$0xf]
    %v388 = vld [vmem:[%s6 + $0x4] sm:$0xf]
    %v389 = vld [vmem:[%s6 + $0x8] sm:$0xf]
    %v390 = vld [vmem:[%s6 + $0xc] sm:$0xf]
    %v391 = vld [vmem:[%s7] sm:$0x1]
    %v393 = vlaneseq
    %v394 = vshrl.u32 %v393, 7
    %v395 = vsub.s32 0, %v394
    %v396 = vrot.slane %v391, %v395
    %v402 = vunpack.c.l.b16 %v387
    %v403 = vunpack.c.l.b16 %v388
    %v404 = vunpack.c.l.b16 %v389
    %v405 = vunpack.c.l.b16 %v390
    %v406 = vpack.c.b16 %v403, %v402
    %v407 = vpack.c.b16 %v405, %v404
    %v411 = vsel %vm381, %v386, 0
    %413 = vmatprep.subr.bf16.mxu0 0
    %414 = vmatpush1.bf16.msra.mxu0 %v406
    %415 = vmatprep.subr.bf16.mxu0 0
    %416 = vmatpush1.bf16.msra.mxu0 %v407
    %417 = vmatprep.subr.bf16.mxu0 0
    %418 = vmatpush1.bf16.msra.mxu0 0
    %419 = vmatprep.subr.bf16.mxu0 0
    %420 = vmatpush1.bf16.msra.mxu0 0
    %421 = vmatprep.subr.bf16.mxu0 0
    %422 = vmatpush1.bf16.msra.mxu0 0
    %423 = vmatprep.subr.bf16.mxu0 0
    %424 = vmatpush1.bf16.msra.mxu0 0
    %425 = vmatprep.subr.bf16.mxu0 0
    %426 = vmatpush1.bf16.msra.mxu0 0
    %427 = vmatprep.subr.bf16.mxu0 0
    %428 = vmatpush1.bf16.msra.mxu0 0
    %429 = vmatprep.subr.bf16.mxu0 0
    %430 = vmatpush1.bf16.msra.mxu0 0
    %431 = vmatprep.subr.bf16.mxu0 0
    %432 = vmatpush1.bf16.msra.mxu0 0
    %433 = vmatprep.subr.bf16.mxu0 0
    %434 = vmatpush1.bf16.msra.mxu0 0
    %435 = vmatprep.subr.bf16.mxu0 0
    %436 = vmatpush1.bf16.msra.mxu0 0
    %437 = vmatprep.subr.bf16.mxu0 0
    %438 = vmatpush1.bf16.msra.mxu0 0
    %439 = vmatprep.subr.bf16.mxu0 0
    %440 = vmatpush1.bf16.msra.mxu0 0
    %441 = vmatprep.subr.bf16.mxu0 0
    %442 = vmatpush1.bf16.msra.mxu0 0
    %443 = vmatprep.subr.bf16.mxu0 0
    %444 = vmatpush1.bf16.msra.mxu0 0
    %445 = vmatprep.mubr.bf16.mxu0 0
    %446 = vmatmul.mubr.bf16.gmra.mrb[0].mxu0 %v411
    %v447 = vpop.f32.mrb[0].mxu0
    %v448 = vadd.f32 %v396, %v447
    %v449 = vpop.f32.mrb[0].mxu0
    %v450 = vpop.f32.mrb[0].mxu0
    %v451 = vpop.f32.mrb[0].mxu0
    %452 = vdwg.mxu0
    %v453 = vmax.f32 %v448, 0.0
    %v454 = vpack.c.bf16 %v453, %v453
    %v455 = vld [vmem:[#allocation2] sm:$0xff]
    %v456 = vld [vmem:[#allocation2 + $0x8] sm:$0xff]
    %v457 = vld [vmem:[#allocation2 + $0x10] sm:$0xff]
    %v458 = vld [vmem:[#allocation2 + $0x18] sm:$0xff]
    %v459 = vld [vmem:[#allocation2 + $0x20] sm:$0xff]
    %v460 = vld [vmem:[#allocation2 + $0x28] sm:$0xff]
    %v461 = vld [vmem:[#allocation2 + $0x30] sm:$0xff]
    %v462 = vld [vmem:[#allocation2 + $0x38] sm:$0xff]
    %v463 = vld [vmem:[#allocation2 + $0x40] sm:$0xff]
    %v464 = vld [vmem:[#allocation2 + $0x48] sm:$0xff]
    %v465 = vld [vmem:[#allocation2 + $0x50] sm:$0xff]
    %v466 = vld [vmem:[#allocation2 + $0x58] sm:$0xff]
    %v467 = vld [vmem:[#allocation2 + $0x60] sm:$0xff]
    %v468 = vld [vmem:[#allocation2 + $0x68] sm:$0xff]
    %v469 = vld [vmem:[#allocation2 + $0x70] sm:$0xff]
    %v470 = vld [vmem:[#allocation2 + $0x78] sm:$0xff]
    %v471 = vld [vmem:[%s9] sm:$0x3]
    %v473 = vlaneseq
    %v474 = vshrl.u32 %v473, 7
    %v475 = vsub.s32 0, %v474
    %v476 = vrot.slane %v471, %v475
    %v477 = vlaneseq
    %v478 = vshrl.u32 %v477, 7
    %v479 = vsub.s32 1, %v478
    %v480 = vrot.slane %v471, %v479
    %v499 = vunpack.c.l.b16 %v455
    %v500 = vunpack.c.h.b16 %v455
    %v501 = vunpack.c.l.b16 %v456
    %v502 = vunpack.c.h.b16 %v456
    %v503 = vunpack.c.l.b16 %v457
    %v504 = vunpack.c.h.b16 %v457
    %v505 = vunpack.c.l.b16 %v458
    %v506 = vunpack.c.h.b16 %v458
    %v507 = vunpack.c.l.b16 %v459
    %v508 = vunpack.c.h.b16 %v459
    %v509 = vunpack.c.l.b16 %v460
    %v510 = vunpack.c.h.b16 %v460
    %v511 = vunpack.c.l.b16 %v461
    %v512 = vunpack.c.h.b16 %v461
    %v513 = vunpack.c.l.b16 %v462
    %v514 = vunpack.c.h.b16 %v462
    %v515 = vunpack.c.l.b16 %v463
    %v516 = vunpack.c.h.b16 %v463
    %v517 = vunpack.c.l.b16 %v464
    %v518 = vunpack.c.h.b16 %v464
    %v519 = vunpack.c.l.b16 %v465
    %v520 = vunpack.c.h.b16 %v465
    %v521 = vunpack.c.l.b16 %v466
    %v522 = vunpack.c.h.b16 %v466
    %v523 = vunpack.c.l.b16 %v467
    %v524 = vunpack.c.h.b16 %v467
    %v525 = vunpack.c.l.b16 %v468
    %v526 = vunpack.c.h.b16 %v468
    %v527 = vunpack.c.l.b16 %v469
    %v528 = vunpack.c.h.b16 %v469
    %v529 = vunpack.c.l.b16 %v470
    %v530 = vunpack.c.h.b16 %v470
    %v531 = vpack.c.b16 %v501, %v499
    %v532 = vpack.c.b16 %v502, %v500
    %v533 = vpack.c.b16 %v505, %v503
    %v534 = vpack.c.b16 %v506, %v504
    %v535 = vpack.c.b16 %v509, %v507
    %v536 = vpack.c.b16 %v510, %v508
    %v537 = vpack.c.b16 %v513, %v511
    %v538 = vpack.c.b16 %v514, %v512
    %v539 = vpack.c.b16 %v517, %v515
    %v540 = vpack.c.b16 %v518, %v516
    %v541 = vpack.c.b16 %v521, %v519
    %v542 = vpack.c.b16 %v522, %v520
    %v543 = vpack.c.b16 %v525, %v523
    %v544 = vpack.c.b16 %v526, %v524
    %v545 = vpack.c.b16 %v529, %v527
    %v546 = vpack.c.b16 %v530, %v528
    %563 = vmatprep.subr.bf16.mxu0 %v532
    %564 = vmatpush1.bf16.msra.mxu0 %v531
    %565 = vmatprep.subr.bf16.mxu0 %v534
    %566 = vmatpush1.bf16.msra.mxu0 %v533
    %567 = vmatprep.subr.bf16.mxu0 %v536
    %568 = vmatpush1.bf16.msra.mxu0 %v535
    %569 = vmatprep.subr.bf16.mxu0 %v538
    %570 = vmatpush1.bf16.msra.mxu0 %v537
    %571 = vmatprep.subr.bf16.mxu0 %v540
    %572 = vmatpush1.bf16.msra.mxu0 %v539
    %573 = vmatprep.subr.bf16.mxu0 %v542
    %574 = vmatpush1.bf16.msra.mxu0 %v541
    %575 = vmatprep.subr.bf16.mxu0 %v544
    %576 = vmatpush1.bf16.msra.mxu0 %v543
    %577 = vmatprep.subr.bf16.mxu0 %v546
    %578 = vmatpush1.bf16.msra.mxu0 %v545
    %579 = vmatprep.subr.bf16.mxu0 0
    %580 = vmatpush1.bf16.msra.mxu0 0
    %581 = vmatprep.subr.bf16.mxu0 0
    %582 = vmatpush1.bf16.msra.mxu0 0
    %583 = vmatprep.subr.bf16.mxu0 0
    %584 = vmatpush1.bf16.msra.mxu0 0
    %585 = vmatprep.subr.bf16.mxu0 0
    %586 = vmatpush1.bf16.msra.mxu0 0
    %587 = vmatprep.subr.bf16.mxu0 0
    %588 = vmatpush1.bf16.msra.mxu0 0
    %589 = vmatprep.subr.bf16.mxu0 0
    %590 = vmatpush1.bf16.msra.mxu0 0
    %591 = vmatprep.subr.bf16.mxu0 0
    %592 = vmatpush1.bf16.msra.mxu0 0
    %593 = vmatprep.subr.bf16.mxu0 0
    %594 = vmatpush1.bf16.msra.mxu0 0
    %595 = vmatprep.mubr.bf16.mxu0 0
    %596 = vmatmul.mubr.bf16.gmra.mrb[0].mxu0 %v454
    %v597 = vpop.f32.mrb[0].mxu0
    %v598 = vadd.f32 %v476, %v597
    %v599 = vpop.f32.mrb[0].mxu0
    %v600 = vadd.f32 %v480, %v599
    %v601 = vpop.f32.mrb[0].mxu0
    %v602 = vpop.f32.mrb[0].mxu0
    %603 = vdwg.mxu0
    %v604 = vand.u32 2147483647, %v598
    %v605 = vand.u32 2147483647, %v600
    %v606 = vsub.f32 0.0, %v604
    %v607 = vsub.f32 0.0, %v605
    %v608 = vmul.f32 %v606, 1.442695
    %v609 = vpow.pop %v608
    %v610 = vmul.f32 %v607, 1.442695
    %v611 = vpow.pop %v610
    %v612 = vadd.f32 %v609, 1.0
    %v613 = vadd.f32 %v611, 1.0
    %v614 = vrcp.pop %v612
    %v615 = vrcp.pop %v613
    %vm616 = vcmp.ge.f32.partialorder %v598, 0.0
    %vm617 = vcmp.ge.f32.partialorder %v600, 0.0
    %v618 = vmul.f32 %v609, %v614
    %v619 = vmul.f32 %v611, %v615
    %v620 = vsel %vm616, %v614, %v618
    %v621 = vsel %vm617, %v615, %v619
    %v622 = vmin.f32 %v620, 1.0
    %v623 = vmin.f32 %v621, 1.0
    %v624 = vpack.c.bf16 %v622, %v622
    %v625 = vpack.c.bf16 %v623, %v623
    %v628 = vunpack.c.l.b16 %v624
    %v629 = vunpack.c.l.b16 %v625
    %v630 = vpack.c.b16 %v629, %v628
    %632 = vst [vmem:[%s11] sm:$0xff] %v630
    %v633 = vunpack.c.l.bf16 %v53
    %v634 = vunpack.c.h.bf16 %v53
    %v635 = vmax.f32 %v598, 0.0
    %v636 = vmax.f32 %v600, 0.0
    %v637 = vmul.f32 %v633, %v598
    %v638 = vmul.f32 %v634, %v600
    %v639 = vsub.f32 %v635, %v637
    %v640 = vsub.f32 %v636, %v638
    %v641 = vadd.f32 %v609, 1.0
    %v642 = vlog2.pop %v641
    %v643 = vmul.f32 %v642, 0.6931472
    %v644 = vmul.f32 -0.5, %v609
    %v645 = vadd.f32 %v644, 1.0
    %v646 = vmul.f32 %v645, %v609
    %v647 = vand.u32 2147483647, %v609
    %vm648 = vcmp.lt.f32.partialorder %v647, 0.0004427343
    %v649 = vsel %vm648, %v646, %v643
    %v650 = vadd.f32 %v611, 1.0
    %v651 = vlog2.pop %v650
    %v652 = vmul.f32 %v651, 0.6931472
    %v653 = vmul.f32 -0.5, %v611
    %v654 = vadd.f32 %v653, 1.0
    %v655 = vmul.f32 %v654, %v611
    %v656 = vand.u32 2147483647, %v611
    %vm657 = vcmp.lt.f32.partialorder %v656, 0.0004427343
    %v658 = vsel %vm657, %v655, %v652
    %v659 = vadd.f32 %v639, %v649
    %v660 = vadd.f32 %v640, %v658
    %661 = vst [vmem:[%s12] sm:$0xff] %v659
    %662 = vst [vmem:[%s12 + $0x8] sm:$0xff] %v660
    // Predicated region
    $region46: #{vae_forward.1} parent=1 // pred_check
      _
    $region47: #{vae_forward.1} parent=1 // pred_check_branch
      %664 = sbr.rel (0) target = $region49
    $region48: #{vae_forward.1} parent=1 // pred_region
      _
    $region49: #{vae_forward.1} parent=1 // pred_fallthru
      _
    // Predicated region
    $region50: #{vae_forward.1} parent=1 // pred_check
      _
    $region51: #{vae_forward.1} parent=1 // pred_check_branch
      %666 = sbr.rel (0) target = $region53
    $region52: #{vae_forward.1} parent=1 // pred_region
      _
    $region53: #{vae_forward.1} parent=1 // pred_fallthru
      _
    // Predicated region
    $region54: #{vae_forward.1} parent=1 // pred_check
      _
    $region55: #{vae_forward.1} parent=1 // pred_check_branch
      %668 = sbr.rel (0) target = $region57
    $region56: #{vae_forward.1} parent=1 // pred_region
      _
    $region57: #{vae_forward.1} parent=1 // pred_fallthru
      _
    // Predicated region
    $region58: #{vae_forward.1} parent=1 // pred_check
      _
    $region59: #{vae_forward.1} parent=1 // pred_check_branch
      %670 = sbr.rel (0) target = $region61
    $region60: #{vae_forward.1} parent=1 // pred_region
      _
    $region61: #{vae_forward.1} parent=1 // pred_fallthru
      _
    // Predicated region
    $region62: #{vae_forward.1} parent=1 // pred_check
      _
    $region63: #{vae_forward.1} parent=1 // pred_check_branch
      %672 = sbr.rel (0) target = $region65
    $region64: #{vae_forward.1} parent=1 // pred_region
      _
    $region65: #{vae_forward.1} parent=1 // pred_fallthru
      _
    // Predicated region
    $region66: #{vae_forward.1} parent=1 // pred_check
      _
    $region67: #{vae_forward.1} parent=1 // pred_check_branch
      %674 = sbr.rel (0) target = $region69
    $region68: #{vae_forward.1} parent=1 // pred_region
      _
    $region69: #{vae_forward.1} parent=1 // pred_fallthru
      _
    %675 = vsyncpa [#allocation3], 1

</llo_original>
